<compile_context>
chip_gen: v7x
topology: tpu7x:2x2x1
jax: 0.10.0
libtpu: 0.0.40
codegen_flags: <defaults>
</compile_context>

<pallas_src>
import functools

import jax
import jax.numpy as jnp
from jax.experimental import pallas as pl
from jax.experimental.pallas import tpu as pltpu


def netl1_kernel(x_ref, w_ref, out_ref):
    # x_ref: (TB, nin) f32, w_ref: (nin, nout) bf16 (VMEM-resident),
    # out_ref: (TB, nout) f32
    x = x_ref[...].astype(jnp.bfloat16)  # in-kernel cast: hidden under DMA pipeline
    out_ref[...] = jnp.dot(
        x, w_ref[...], preferred_element_type=jnp.float32
    ).astype(out_ref.dtype)


def _pick_batch_tile(B, nin, nout, vmem_budget_bytes=8 << 20):
    """Largest multiple-of-8 batch tile whose double-buffered blocks fit the budget."""
    per_row = 2 * (nin * 4) + 2 * (nout * 4)  # 2x-buffered f32 x-block + f32 out-block
    tb = vmem_budget_bytes // max(per_row, 1)
    tb = max(8, min(tb, 4096))
    return (tb // 8) * 8


def netl1_forward(x, w_t, *, block_b=None):
    """Fused forward of NetL1.

    x:   (B, nin) float32
    w_t: (nin, nout) float32 -- the PyTorch weight (nout, nin), pre-transposed
                                so the kernel does a plain `x @ w_t`.
    Returns (B, nout) float32.
    """
    B, nin = x.shape
    nin_w, nout = w_t.shape
    assert nin == nin_w, "weight / input feature mismatch"

    # One-time cast of the tiny, grid-resident weight to the MXU-native dtype.
    w_bf = w_t.astype(jnp.bfloat16)

    if block_b is None:
        block_b = _pick_batch_tile(B, nin, nout)
    # Batch tile: full array if it fits in one block, otherwise a multiple-of-8
    # tile (last partial block handled by Pallas' ragged-edge masking).
    if B <= block_b:
        tb = B
    else:
        assert block_b % 8 == 0, "block_b must be a multiple of 8"
        tb = block_b
    grid = (pl.cdiv(B, tb),)

    cost = pl.CostEstimate(
        flops=2 * B * nin * nout,
        transcendentals=0,
        bytes_accessed=B * nin * 4 + nin * nout * 2 + B * nout * 4,
    )

    out = pl.pallas_call(
        netl1_kernel,
        out_shape=jax.ShapeDtypeStruct((B, nout), jnp.float32),
        grid=grid,
        in_specs=[
            pl.BlockSpec((tb, nin), lambda i: (i, 0)),     # streamed activations
            pl.BlockSpec((nin, nout), lambda i: (0, 0)),   # resident weight
        ],
        out_specs=pl.BlockSpec((tb, nout), lambda i: (i, 0)),
        compiler_params=pltpu.CompilerParams(
            dimension_semantics=("parallel",),
        ),
        cost_estimate=cost,
    )(x, w_bf)
    return out


def init_params(key, nin, nout):
    """Mirror NetL1.__init__: Linear(nin, nout, bias=False), weight ~ N(0, 0.03)."""
    w = 0.03 * jax.random.normal(key, (nout, nin), dtype=jnp.float32)
    return {"w_t": w.T}  # (nin, nout), pre-transposed for `x @ w_t`


def reference_forward(x, w_t):
    """Pure-JAX f32 reference of the module's math (matches PyTorch forward)."""
    return x @ w_t


if __name__ == "__main__":
    key = jax.random.PRNGKey(0)
    kx, kw = jax.random.split(key)

    # Small shapes consistent with the module; block_b=8 so the batch grid has
    # 4 steps and the pipelined / parallel path is actually exercised.
    B, nin, nout = 32, 8, 4
    x = jax.random.normal(kx, (B, nin), dtype=jnp.float32)
    params = init_params(kw, nin, nout)

    fwd = functools.partial(netl1_forward, block_b=8)
    out = fwd(x, params["w_t"])
    jax.block_until_ready(out)

    out_ref = reference_forward(x, params["w_t"])
    assert out.shape == (B, nout)
    # bf16 MXU inputs with f32 accumulation -> loose-but-safe tolerance vs f32 ref.
    assert jnp.allclose(out, out_ref, atol=1e-2, rtol=1e-2)

    print("KERNEL_OK")
</pallas_src>

<mosaic_0001>
module attributes {stable_mosaic.version = 11 : i64} {
  func.func @netl1_kernel(%arg0: i32, %arg1: memref<8x8xf32, #tpu.memory_space<vmem>>, %arg2: memref<8x4xbf16, #tpu.memory_space<vmem>>, %arg3: memref<8x4xf32, #tpu.memory_space<vmem>>) attributes {dimension_semantics = [#tpu.dimension_semantics<parallel>], iteration_bounds = array<i64: 4>, scalar_prefetch = 0 : i64, scratch_operands = 0 : i64, tpu.core_type = #tpu.core_type<tc>, window_params = [{transform_indices = @transform_0, window_bounds = array<i64: 8, 8>}, {pipeline_mode = #tpu.pipeline_mode<synchronous>, transform_indices = @transform_1, window_bounds = array<i64: 8, 4>}, {transform_indices = @transform_2, window_bounds = array<i64: 8, 4>}]} {
    %c0 = arith.constant 0 : index
    %c0_0 = arith.constant 0 : index
    %0 = vector.load %arg1[%c0, %c0_0] : memref<8x8xf32, #tpu.memory_space<vmem>>, vector<8x8xf32>
    %1 = arith.truncf %0 : vector<8x8xf32> to vector<8x8xbf16>
    %c0_1 = arith.constant 0 : index
    %c0_2 = arith.constant 0 : index
    %2 = vector.load %arg2[%c0_1, %c0_2] : memref<8x4xbf16, #tpu.memory_space<vmem>>, vector<8x4xbf16>
    %cst = arith.constant dense<0.000000e+00> : vector<8x4xf32>
    %3 = tpu.matmul %1, %2, %cst {dimension_numbers = #tpu.dot_dimension_numbers<[1], [0], [0], [1], [0, 0, 1, 1], [], []>} : vector<8x8xbf16>, vector<8x4xbf16>, vector<8x4xf32> -> vector<8x4xf32>
    %c0_3 = arith.constant 0 : index
    %c0_4 = arith.constant 0 : index
    %4 = vector.load %arg3[%c0_3, %c0_4] : memref<8x4xf32, #tpu.memory_space<vmem>>, vector<8x4xf32>
    tpu.vector_store %arg3[%c0_3, %c0_4], %3 {strides = array<i32>} : memref<8x4xf32, #tpu.memory_space<vmem>>, vector<8x4xf32>,
    return
  }
  func.func @transform_0(%arg0: i32) -> (i32, i32) {
    %c0_i32 = arith.constant 0 : i32
    %c0_i32_0 = arith.constant 0 : i32
    return %arg0, %c0_i32 : i32, i32
  }
  func.func @transform_1(%arg0: i32) -> (i32, i32) {
    %c0_i32 = arith.constant 0 : i32
    %c0_i32_0 = arith.constant 0 : i32
    %c0_i32_1 = arith.constant 0 : i32
    return %c0_i32, %c0_i32_0 : i32, i32
  }
  func.func @transform_2(%arg0: i32) -> (i32, i32) {
    %c0_i32 = arith.constant 0 : i32
    %c0_i32_0 = arith.constant 0 : i32
    return %arg0, %c0_i32 : i32, i32
  }
}

</mosaic_0001>

<llo_original>
// kernel: tpu_custom_call.1
$region0: #{tpu_custom_call.1}
  #allocation0 [shape = 'u32[]', space=smem, size = 0x4, offset = 0x4, fixed_abs, tag = 'smem constant byte address 0x4 - core index']
  #allocation1 [shape = 'u32[144,128]{1,0:T(1,128)}', space=vmem, size = 0x12000, scoped, tag = 'internal scratch']
  %s0 = inlined_call_operand.vmem [shape: f32[32,8], index: 0, kind: input, shape index: {}]
  %s1 = inlined_call_operand.vmem [shape: bf16[8,4], index: 1, kind: input, shape index: {}]
  %s2 = inlined_call_operand.vmem [shape: f32[32,4], index: 2, kind: output, shape index: {}]
  %s3 = sld [smem:[#allocation0]]
  $region41: #{tpu_custom_call.1} parent=0
    _
  %s5 = ssub.s32 1, %s3
  %s6 = scalar_select 0, %s5, %s3
  loop: start=0, step=1, limit=6
  $region2: #{tpu_custom_call.1} parent=0 // loop_pre_header
    _
  $region3: #{tpu_custom_call.1} parent=0 // loop_header
    %s8 = sphi 0, %s12
    %p9 = scmp.ge.s32.totalorder %s8, 6
    %s18 = sphi 0, %s20
    %s21 = sphi 0, %s18
    %s22 = sphi 0, %s21
    %s38 = sphi 0, %s22
    %s42 = sphi 0, %s42
    %s44 = sphi 0, %s42
    %s45 = sphi 0, %s44
    %s59 = sphi 0, %s45
    %s65 = sphi 0, %s67
    %s68 = sphi 0, %s65
    %s69 = sphi 0, %s68
    %s85 = sphi 0, %s69
  $region4: #{tpu_custom_call.1} parent=0 // loop_header_branch
    %11 = sbr.rel (%p9) target = $region8
  $region5: #{tpu_custom_call.1} parent=0 // loop_body
    %s13 = ssub.s32 %s8, 1
    %s14 = ssub.s32 %s8, 2
    %s15 = sadd.s32 %s8, 1
    %s16 = ssub.s32 %s8, %s15
    %p17 = scmp.eq.s32.totalorder %s16, 0
    %s19 = sadd.s32 %s18, 1
    %s20 = scalar_select %p17, %s18, %s19
    %p23 = pneg %p17
    %p24 = scmp.eq.s32.totalorder %s8, 3
    %p25 = por %p23, %p24
    %p26 = scmp.ne.s32.totalorder %s18, %s21
    %p27 = scmp.eq.s32.totalorder %s8, 0
    %p28 = por %p26, %p27
    %p29 = scmp.ne.s32.totalorder %s18, %s21
    %p30 = scmp.eq.s32.totalorder %s13, 3
    %p31 = por %p29, %p30
    %p32 = scmp.ne.s32.totalorder %s21, %s22
    %p33 = scmp.eq.s32.totalorder %s13, 0
    %p34 = por %p32, %p33
    %p35 = scmp.ne.s32.totalorder %s21, %s22
    %p36 = scmp.eq.s32.totalorder %s14, 3
    %p37 = por %p35, %p36
    %p39 = scmp.ne.s32.totalorder %s22, %s38
    %p40 = scmp.eq.s32.totalorder %s14, 0
    %p41 = por %p39, %p40
    %s43 = sadd.s32 %s42, 1
    %p46 = scmp.eq.s32.totalorder %s8, 3
    %p47 = scmp.ne.s32.totalorder %s42, %s44
    %p48 = scmp.eq.s32.totalorder %s8, 0
    %p49 = por %p47, %p48
    %p50 = scmp.ne.s32.totalorder %s42, %s44
    %p51 = scmp.eq.s32.totalorder %s13, 3
    %p52 = por %p50, %p51
    %p53 = scmp.ne.s32.totalorder %s44, %s45
    %p54 = scmp.eq.s32.totalorder %s13, 0
    %p55 = por %p53, %p54
    %p56 = scmp.ne.s32.totalorder %s44, %s45
    %p57 = scmp.eq.s32.totalorder %s14, 3
    %p58 = por %p56, %p57
    %p60 = scmp.ne.s32.totalorder %s45, %s59
    %p61 = scmp.eq.s32.totalorder %s14, 0
    %p62 = por %p60, %p61
    %s63 = ssub.s32 %s8, %s15
    %p64 = scmp.eq.s32.totalorder %s63, 0
    %s66 = sadd.s32 %s65, 1
    %s67 = scalar_select %p64, %s65, %s66
    %p70 = pneg %p64
    %p71 = scmp.eq.s32.totalorder %s8, 3
    %p72 = por %p70, %p71
    %p73 = scmp.ne.s32.totalorder %s65, %s68
    %p74 = scmp.eq.s32.totalorder %s8, 0
    %p75 = por %p73, %p74
    %p76 = scmp.ne.s32.totalorder %s65, %s68
    %p77 = scmp.eq.s32.totalorder %s13, 3
    %p78 = por %p76, %p77
    %p79 = scmp.ne.s32.totalorder %s68, %s69
    %p80 = scmp.eq.s32.totalorder %s13, 0
    %p81 = por %p79, %p80
    %p82 = scmp.ne.s32.totalorder %s68, %s69
    %p83 = scmp.eq.s32.totalorder %s14, 3
    %p84 = por %p82, %p83
    %p86 = scmp.ne.s32.totalorder %s69, %s85
    %p87 = scmp.eq.s32.totalorder %s14, 0
    %p88 = por %p86, %p87
    %p89 = scmp.le.s32.totalorder 1, %s8
    %p90 = scmp.lt.s32.totalorder %s8, 5
    %p91 = pnand %p89, %p90
    %p92 = pneg %p91
    // Predicated region
    $region9: #{tpu_custom_call.1} parent=5 // pred_check
      _
    $region10: #{tpu_custom_call.1} parent=5 // pred_check_branch
      %94 = sbr.rel (%p91) target = $region12
    $region11: #{tpu_custom_call.1} parent=5 // pred_region
      %s95 = ssub.s32 %s8, 1
      // Predicated region
      $region13: #{tpu_custom_call.1} parent=11 // pred_check
        %p96 = pneg %p55
      $region14: #{tpu_custom_call.1} parent=11 // pred_check_branch
        %98 = sbr.rel (%p96) target = $region16
      $region15: #{tpu_custom_call.1} parent=11 // pred_region
        _
      $region16: #{tpu_custom_call.1} parent=11 // pred_fallthru
        _
    $region12: #{tpu_custom_call.1} parent=5 // pred_fallthru
      _
    %p99 = scmp.lt.s32.totalorder %s8, 4
    // Predicated region
    $region17: #{tpu_custom_call.1} parent=5 // pred_check
      %p100 = pneg %p99
    $region18: #{tpu_custom_call.1} parent=5 // pred_check_branch
      %102 = sbr.rel (%p100) target = $region20
    $region19: #{tpu_custom_call.1} parent=5 // pred_region
      // Predicated region
      $region21: #{tpu_custom_call.1} parent=19 // pred_check
        %p103 = pneg %p28
      $region22: #{tpu_custom_call.1} parent=19 // pred_check_branch
        %105 = sbr.rel (%p103) target = $region24
      $region23: #{tpu_custom_call.1} parent=19 // pred_region
        %p106 = scmp.lt.s32.totalorder %s8, 3
        %s107 = scalar_select %p106, %s8, 3
        %s108 = smul.addr %s107, 8
        %s109 = scalar_lea.vmem %s0, %s108
      $region24: #{tpu_custom_call.1} parent=19 // pred_fallthru
        _
    $region20: #{tpu_custom_call.1} parent=5 // pred_fallthru
      _
    %p110 = scmp.le.s32.totalorder 1, %s8
    %p111 = scmp.lt.s32.totalorder %s8, 5
    %p112 = pnand %p110, %p111
    %p113 = pneg %p112
    // Predicated region
    $region25: #{tpu_custom_call.1} parent=5 // pred_check
      _
    $region26: #{tpu_custom_call.1} parent=5 // pred_check_branch
      %115 = sbr.rel (%p112) target = $region28
    $region27: #{tpu_custom_call.1} parent=5 // pred_region
      %s116 = ssub.s32 %s8, 1
      %p117 = scmp.lt.s32.totalorder %s13, 3
      %s118 = scalar_select %p117, %s13, 3
      %s119 = smul.addr %s118, 8
      %s120 = scalar_lea.vmem %s0, %s119
      %p121 = pneg %p34
      %p122 = pneg %p31
      %p123 = pneg %p55
      %p124 = pneg %p52
      %p125 = pneg %p81
      %p126 = pneg %p78
      %p127 = scmp.lt.s32.totalorder %s13, 3
      %s128 = scalar_select %p127, %s13, 3
      %s129 = smul.addr %s128, 8
      %s130 = scalar_lea.vmem %s2, %s129
      %p131 = scmp.lt.s32.totalorder %s13, 3
      %s132 = scalar_select %p131, %s13, 3
      %s133 = smul.addr %s132, 8
      %s134 = scalar_lea.vmem %s0, %s133
      %p135 = scmp.lt.s32.totalorder %s13, 3
      %s136 = scalar_select %p135, %s13, 3
      %s137 = smul.addr %s136, 8
      %s138 = scalar_lea.vmem %s2, %s137
      %v140 = vld [vmem:[%s134] sm:$0xff]
      %v141 = vpack.c.bf16 %v140, %v140
      %v142 = vld [vmem:[%s1] sm:$0xf]
      %vm143 = vcmask 64512
      %v145 = vsel %vm143, %v141, 0
      %vm147 = vcmask 1043456
      %v149 = vsel %vm147, %v142, 0
      %151 = vmatprep.subr.bf16.mxu0 0
      %152 = vmatpush1.bf16.msra.mxu0 %v149
      %153 = vmatprep.subr.bf16.mxu0 0
      %154 = vmatpush1.bf16.msra.mxu0 0
      %155 = vmatprep.subr.bf16.mxu0 0
      %156 = vmatpush1.bf16.msra.mxu0 0
      %157 = vmatprep.subr.bf16.mxu0 0
      %158 = vmatpush1.bf16.msra.mxu0 0
      %159 = vmatprep.subr.bf16.mxu0 0
      %160 = vmatpush1.bf16.msra.mxu0 0
      %161 = vmatprep.subr.bf16.mxu0 0
      %162 = vmatpush1.bf16.msra.mxu0 0
      %163 = vmatprep.subr.bf16.mxu0 0
      %164 = vmatpush1.bf16.msra.mxu0 0
      %165 = vmatprep.subr.bf16.mxu0 0
      %166 = vmatpush1.bf16.msra.mxu0 0
      %167 = vmatprep.subr.bf16.mxu0 0
      %168 = vmatpush1.bf16.msra.mxu0 0
      %169 = vmatprep.subr.bf16.mxu0 0
      %170 = vmatpush1.bf16.msra.mxu0 0
      %171 = vmatprep.subr.bf16.mxu0 0
      %172 = vmatpush1.bf16.msra.mxu0 0
      %173 = vmatprep.subr.bf16.mxu0 0
      %174 = vmatpush1.bf16.msra.mxu0 0
      %175 = vmatprep.subr.bf16.mxu0 0
      %176 = vmatpush1.bf16.msra.mxu0 0
      %177 = vmatprep.subr.bf16.mxu0 0
      %178 = vmatpush1.bf16.msra.mxu0 0
      %179 = vmatprep.subr.bf16.mxu0 0
      %180 = vmatpush1.bf16.msra.mxu0 0
      %181 = vmatprep.subr.bf16.mxu0 0
      %182 = vmatpush1.bf16.msra.mxu0 0
      %183 = vmatprep.mubr.bf16.mxu0 0
      %184 = vmatmul.mubr.bf16.gmra.mrb[0].mxu0 %v145
      %v185 = vpop.f32.mrb[0].mxu0
      %v186 = vadd.f32 0.0, %v185
      %v187 = vpop.f32.mrb[0].mxu0
      %v188 = vpop.f32.mrb[0].mxu0
      %v189 = vpop.f32.mrb[0].mxu0
      %190 = vdwg.mxu0
      %vm191 = vcmask 31744
      %192 = vst.msk [vmem:[%s138] sm:$0xff] %vm191, %v186
      %p193 = scmp.lt.s32.totalorder %s13, 3
      %s194 = scalar_select %p193, %s13, 3
      %s195 = smul.addr %s194, 8
      %s196 = scalar_lea.vmem %s2, %s195
      // Predicated region
      $region29: #{tpu_custom_call.1} parent=27 // pred_check
        %p197 = pneg %p78
      $region30: #{tpu_custom_call.1} parent=27 // pred_check_branch
        %199 = sbr.rel (%p197) target = $region32
      $region31: #{tpu_custom_call.1} parent=27 // pred_region
        _
      $region32: #{tpu_custom_call.1} parent=27 // pred_fallthru
        _
    $region28: #{tpu_custom_call.1} parent=5 // pred_fallthru
      _
    %p200 = scmp.le.s32.totalorder 2, %s8
    // Predicated region
    $region33: #{tpu_custom_call.1} parent=5 // pred_check
      %p201 = pneg %p200
    $region34: #{tpu_custom_call.1} parent=5 // pred_check_branch
      %203 = sbr.rel (%p201) target = $region36
    $region35: #{tpu_custom_call.1} parent=5 // pred_region
      %s204 = ssub.s32 %s8, 2
      // Predicated region
      $region37: #{tpu_custom_call.1} parent=35 // pred_check
        %p205 = pneg %p84
      $region38: #{tpu_custom_call.1} parent=35 // pred_check_branch
        %207 = sbr.rel (%p205) target = $region40
      $region39: #{tpu_custom_call.1} parent=35 // pred_region
        %p208 = scmp.lt.s32.totalorder %s14, 3
        %s209 = scalar_select %p208, %s14, 3
        %s210 = smul.addr %s209, 8
        %s211 = scalar_lea.vmem %s2, %s210
      $region40: #{tpu_custom_call.1} parent=35 // pred_fallthru
        _
    $region36: #{tpu_custom_call.1} parent=5 // pred_fallthru
      _
  $region6: #{tpu_custom_call.1} parent=0 // loop_footer
    %s12 = sadd.s32 1, %s8
  $region7: #{tpu_custom_call.1} parent=0 // loop_footer_branch
    %7 = sbr.rel target = $region3
  $region8: #{tpu_custom_call.1} parent=0 // loop_exit
    _

</llo_original>
